<compile_context>
chip_gen: v5e
topology: v5e:2x2
jax: 0.10.0
libtpu: 0.0.40
codegen_flags: <defaults>
</compile_context>

<pallas_src>
import functools

import jax
import jax.numpy as jnp
from jax.experimental import pallas as pl
from jax.experimental.pallas import tpu as pltpu


# ----------------------------------------------------------------------------
# Hardware-dependent tiling parameters
# ----------------------------------------------------------------------------
def _hw_params():
    """Return (device_kind_lowercase, target_native_tile_bytes, vmem_limit)."""
    try:
        kind = jax.devices()[0].device_kind.lower()
    except Exception:
        kind = ""
    vmem_cap = None
    try:
        info = pltpu.get_tpu_info()
        vmem_cap = getattr(info, "vmem_capacity_bytes", None)
    except Exception:
        vmem_cap = None
    if vmem_cap is None:
        vmem_cap = (64 * 1024 * 1024
                    if ("v7" in kind or "tpu7" in kind) else 128 * 1024 * 1024)

    if vmem_cap <= 64 * 1024 * 1024:
        # v7x: 64 MiB VMEM per TensorCore -> smaller native tiles, tighter cap.
        target_tile_bytes = 4 * 1024 * 1024
        vmem_limit = 48 * 1024 * 1024
    elif "v5" in kind:
        # v5e/v5p: 128 MiB physical, conservative scoped default -> raise it.
        target_tile_bytes = 8 * 1024 * 1024
        vmem_limit = 64 * 1024 * 1024
    else:
        # v6e (and other 128 MiB parts).
        target_tile_bytes = 8 * 1024 * 1024
        vmem_limit = 80 * 1024 * 1024
    return kind, target_tile_bytes, vmem_limit


def _round_up(x, m):
    return ((x + m - 1) // m) * m


def _pick_tile_n(n, c_block, itemsize, target_tile_bytes):
    """Row-tile size in NATIVE-dtype bytes: big enough to hide the ~0.35 us
    per-grid-step overhead, small enough for double-buffering under the
    per-generation VMEM budget, a multiple of 8 sublanes, and split so that
    mid-sized N produces >= 2 tiles (both v7x TensorCores get work)."""
    if n <= 8:
        return n                                  # single full-extent block
    rows = target_tile_bytes // max(1, c_block * itemsize)
    rows = max(8, min(4096, rows - rows % 8))
    if n >= 16:
        # guarantee at least two grid tiles so the "parallel" axis can shard
        # across both TensorCores on v7x (harmless on single-TC chips).
        rows = min(rows, _round_up(pl.cdiv(n, 2), 8))
    rows = min(rows, (n // 8) * 8)                # ragged tail handled by mask
    return max(8, rows)


# ----------------------------------------------------------------------------
# Kernel 1: row-tiled (whole class dimension in one block)
# ----------------------------------------------------------------------------
def _ce_rowtile_kernel(n_valid_ref, x_ref, t_ref, out_ref, *, tile_n,
                       native_reduce):
    """One row-tile of cross entropy -> a single (1, 1) partial sum."""
    i = pl.program_id(0)
    n_valid = n_valid_ref[0]

    x = x_ref[...]                                  # native dtype (TILE_N, C)
    if not native_reduce:
        x = x.astype(jnp.float32)                   # v5e / f32 inputs
    t = t_ref[...]                                  # (TILE_N, 1) int32
    tn, c = x.shape

    # Row max + shift in the (possibly bf16) native dtype; upcast only (x - m).
    m = jnp.max(x, axis=-1, keepdims=True)          # (TILE_N, 1)
    xm = (x - m).astype(jnp.float32)                # (TILE_N, C) f32, reused
    lse = jnp.log(jnp.sum(jnp.exp(xm), axis=-1, keepdims=True))   # (TILE_N, 1)

    # Masked-select gather of the target's shifted logit (no one-hot multiply).
    cols = jax.lax.broadcasted_iota(jnp.int32, (tn, c), 1)
    xt_m = jnp.sum(jnp.where(cols == t, xm, 0.0), axis=-1, keepdims=True)

    # Row-validity select handles the ragged final block (garbage rows -> 0,
    # select never propagates NaN/Inf from the unselected branch).
    rows = jax.lax.broadcasted_iota(jnp.int32, (tn, 1), 0) + i * tile_n
    loss_rows = jnp.where(rows < n_valid, lse - xt_m, 0.0)

    out_ref[...] = jnp.sum(loss_rows, keepdims=True)               # (1, 1)


# ----------------------------------------------------------------------------
# Kernel 2: row + column tiled (online softmax for large class counts)
# ----------------------------------------------------------------------------
def _ce_coltile_kernel(n_valid_ref, x_ref, t_ref, out_ref,
                       m_sc, l_sc, xt_sc, *, tile_n, tile_c, c_total):
    """Flash-style cross entropy: running max / sum-of-exp over column tiles."""
    i = pl.program_id(0)
    j = pl.program_id(1)
    n_valid = n_valid_ref[0]

    @pl.when(j == 0)
    def _():
        m_sc[...] = jnp.full_like(m_sc, -jnp.inf)
        l_sc[...] = jnp.zeros_like(l_sc)
        xt_sc[...] = jnp.zeros_like(xt_sc)

    # TODO(synk): keep the max/compare in native bf16 here too (as in the
    # row-tiled kernel) to cut VALU passes for bf16 inputs on v6e/v7x.
    x = x_ref[...].astype(jnp.float32)              # (TILE_N, TILE_C)
    t = t_ref[...]                                  # (TILE_N, 1) int32
    tn, tc = x.shape

    cols = jax.lax.broadcasted_iota(jnp.int32, (tn, tc), 1) + j * tile_c

    # Accumulate the raw target logit (its column lives in exactly one tile).
    xt_sc[...] += jnp.sum(jnp.where(cols == t, x, 0.0), axis=-1, keepdims=True)

    # Mask ragged trailing columns before they touch the max / sum-of-exp.
    x = jnp.where(cols < c_total, x, -jnp.inf)
    m_tile = jnp.max(x, axis=-1, keepdims=True)
    m_new = jnp.maximum(m_sc[...], m_tile)
    l_sc[...] = (l_sc[...] * jnp.exp(m_sc[...] - m_new)
                 + jnp.sum(jnp.exp(x - m_new), axis=-1, keepdims=True))
    m_sc[...] = m_new

    @pl.when(j == pl.num_programs(1) - 1)
    def _():
        rows = jax.lax.broadcasted_iota(jnp.int32, (tn, 1), 0) + i * tile_n
        loss_rows = jnp.where(rows < n_valid,
                              m_sc[...] + jnp.log(l_sc[...]) - xt_sc[...], 0.0)
        out_ref[...] = jnp.sum(loss_rows, keepdims=True)            # (1, 1)


# ----------------------------------------------------------------------------
# Wrapper
# ----------------------------------------------------------------------------
def cross_entropy_pallas(logits, targets, *, tile_c=None):
    """logits: (N, C) float (f32/bf16/...); targets: (N,) int class indices.
    Returns scalar f32 mean cross-entropy, matching F.cross_entropy.
    `tile_c` forces the column-tiled (online-softmax) path with that width."""
    n, c = logits.shape
    itemsize = jnp.dtype(logits.dtype).itemsize
    kind, target_tile_bytes, vmem_limit = _hw_params()
    # bf16/fp16 max & subtract on the VPU only where bf16 VALU exists.
    native_reduce = (itemsize < 4) and any(s in kind for s in ("v6", "v7", "tpu7"))

    # No padding of anything: ragged final blocks + in-kernel masks handle it.
    t2 = targets.astype(jnp.int32).reshape(n, 1)
    n_arr = jnp.full((1,), n, dtype=jnp.int32)      # scalar-prefetch (SMEM)

    use_cols = (tile_c is not None) or (c >= 16384)

    if not use_cols:
        tile_n = _pick_tile_n(n, c, itemsize, target_tile_bytes)
        num_tiles = pl.cdiv(n, tile_n)
        partials = pl.pallas_call(
            functools.partial(_ce_rowtile_kernel, tile_n=tile_n,
                              native_reduce=native_reduce),
            out_shape=jax.ShapeDtypeStruct((num_tiles, 1), jnp.float32),
            grid_spec=pltpu.PrefetchScalarGridSpec(
                num_scalar_prefetch=1,
                grid=(num_tiles,),
                in_specs=[
                    pl.BlockSpec((tile_n, c), lambda i, nv: (i, 0)),
                    pl.BlockSpec((tile_n, 1), lambda i, nv: (i, 0)),
                ],
                out_specs=pl.BlockSpec((1, 1), lambda i, nv: (i, 0)),
            ),
            compiler_params=pltpu.CompilerParams(
                dimension_semantics=("parallel",),
                vmem_limit_bytes=vmem_limit,
            ),
        )(n_arr, logits, t2)
    else:
        if tile_c is None:
            tile_c = 2048
        if tile_c >= c:
            tile_c = c                               # full-extent column block
        else:
            tile_c = max(128, (tile_c // 128) * 128)  # lane-aligned column tile
        tile_n = _pick_tile_n(n, tile_c, itemsize, target_tile_bytes)
        num_row_tiles = pl.cdiv(n, tile_n)
        num_col_tiles = pl.cdiv(c, tile_c)
        partials = pl.pallas_call(
            functools.partial(_ce_coltile_kernel, tile_n=tile_n,
                              tile_c=tile_c, c_total=c),
            out_shape=jax.ShapeDtypeStruct((num_row_tiles, 1), jnp.float32),
            grid_spec=pltpu.PrefetchScalarGridSpec(
                num_scalar_prefetch=1,
                grid=(num_row_tiles, num_col_tiles),
                in_specs=[
                    pl.BlockSpec((tile_n, tile_c), lambda i, j, nv: (i, j)),
                    pl.BlockSpec((tile_n, 1), lambda i, j, nv: (i, 0)),
                ],
                out_specs=pl.BlockSpec((1, 1), lambda i, j, nv: (i, 0)),
                scratch_shapes=[pltpu.VMEM((tile_n, 1), jnp.float32)] * 3,
            ),
            compiler_params=pltpu.CompilerParams(
                dimension_semantics=("parallel", "arbitrary"),
                vmem_limit_bytes=vmem_limit,
            ),
        )(n_arr, logits, t2)

    # Tiny finalize in JAX: sum per-tile partials and apply the 1/N mean.
    return jnp.sum(partials) / jnp.float32(n)


def _reference(logits, targets):
    logp = jax.nn.log_softmax(logits.astype(jnp.float32), axis=-1)
    return -jnp.mean(logp[jnp.arange(logits.shape[0]), targets])


if __name__ == "__main__":
    key = jax.random.PRNGKey(0)
    k_x, k_t, k_x2, k_t2, k_x3, k_t3 = jax.random.split(key, 6)

    # Case 1: small f32 batch (matches the PyTorch module's (minibatch, C) form).
    N, C = 8, 32
    logits = jax.random.normal(k_x, (N, C), dtype=jnp.float32)
    targets = jax.random.randint(k_t, (N,), 0, C, dtype=jnp.int32)
    loss = jax.block_until_ready(cross_entropy_pallas(logits, targets))
    ref = _reference(logits, targets)
    assert jnp.allclose(loss, ref, atol=1e-5, rtol=1e-5), (loss, ref)

    # Case 2: bf16 logits (native-dtype wire + bf16 max/sub on v6e/v7x) with
    # N not a multiple of the tile -> exercises the ragged final row block.
    N2, C2 = 10, 32
    logits2 = jax.random.normal(k_x2, (N2, C2), dtype=jnp.float32).astype(jnp.bfloat16)
    targets2 = jax.random.randint(k_t2, (N2,), 0, C2, dtype=jnp.int32)
    loss2 = jax.block_until_ready(cross_entropy_pallas(logits2, targets2))
    ref2 = _reference(logits2, targets2)
    assert jnp.allclose(loss2, ref2, atol=2e-2, rtol=2e-2), (loss2, ref2)

    # Case 3: force the column-tiled online-softmax path (large-vocab kernel)
    # with ragged rows (N=20) and a ragged final column tile (C=320, tile_c=128).
    N3, C3 = 20, 320
    logits3 = jax.random.normal(k_x3, (N3, C3), dtype=jnp.float32)
    targets3 = jax.random.randint(k_t3, (N3,), 0, C3, dtype=jnp.int32)
    loss3 = jax.block_until_ready(cross_entropy_pallas(logits3, targets3, tile_c=128))
    ref3 = _reference(logits3, targets3)
    assert jnp.allclose(loss3, ref3, atol=1e-5, rtol=1e-5), (loss3, ref3)

    print("KERNEL_OK")
</pallas_src>

<mosaic_0001>
module attributes {stable_mosaic.version = 11 : i64} {
  func.func @_ce_rowtile_kernel(%arg0: i32, %arg1: memref<1xi32, #tpu.memory_space<smem>>, %arg2: memref<8x32xf32, #tpu.memory_space<vmem>>, %arg3: memref<8x1xi32, #tpu.memory_space<vmem>>, %arg4: memref<1x1xf32, #tpu.memory_space<vmem>>) attributes {dimension_semantics = [#tpu.dimension_semantics<parallel>], iteration_bounds = array<i64: 1>, scalar_prefetch = 1 : i64, scratch_operands = 0 : i64, tpu.core_type = #tpu.core_type<tc>, window_params = [{transform_indices = @transform_0, window_bounds = array<i64: 8, 32>}, {transform_indices = @transform_1, window_bounds = array<i64: 8, 1>}, {transform_indices = @transform_2, window_bounds = array<i64: 1, 1>}]} {
    %c0 = arith.constant 0 : index
    %0 = memref.load %arg1[%c0] : memref<1xi32, #tpu.memory_space<smem>>
    %c0_0 = arith.constant 0 : index
    %c0_1 = arith.constant 0 : index
    %1 = vector.load %arg2[%c0_0, %c0_1] : memref<8x32xf32, #tpu.memory_space<vmem>>, vector<8x32xf32>
    %c0_2 = arith.constant 0 : index
    %c0_3 = arith.constant 0 : index
    %2 = vector.load %arg3[%c0_2, %c0_3] : memref<8x1xi32, #tpu.memory_space<vmem>>, vector<8x1xi32>
    %cst = arith.constant dense<0xFF800000> : vector<8xf32>
    %3 = vector.multi_reduction <maximumf>, %1, %cst [1] : vector<8x32xf32> to vector<8xf32>
    %4 = vector.shape_cast %3 : vector<8xf32> to vector<8x1xf32>
    %5 = vector.broadcast %4 : vector<8x1xf32> to vector<8x32xf32>
    %6 = arith.subf %1, %5 : vector<8x32xf32>
    %7 = math.exp %6 : vector<8x32xf32>
    %cst_4 = arith.constant dense<0.000000e+00> : vector<8xf32>
    %8 = vector.multi_reduction <add>, %7, %cst_4 [1] : vector<8x32xf32> to vector<8xf32>
    %9 = vector.shape_cast %8 : vector<8xf32> to vector<8x1xf32>
    %10 = math.log %9 : vector<8x1xf32>
    %11 = tpu.iota {dimensions = array<i32: 1>} : vector<8x32xi32>
    %12 = vector.broadcast %2 : vector<8x1xi32> to vector<8x32xi32>
    %13 = arith.cmpi eq, %11, %12 : vector<8x32xi32>
    %cst_5 = arith.constant 0.000000e+00 : f32
    %14 = vector.broadcast %cst_5 : f32 to vector<8x32xf32>
    %15 = arith.select %13, %6, %14 : vector<8x32xi1>, vector<8x32xf32>
    %cst_6 = arith.constant dense<0.000000e+00> : vector<8xf32>
    %16 = vector.multi_reduction <add>, %15, %cst_6 [1] : vector<8x32xf32> to vector<8xf32>
    %17 = vector.shape_cast %16 : vector<8xf32> to vector<8x1xf32>
    %18 = tpu.iota {dimensions = array<i32: 0>} : vector<8x1xi32>
    %c8_i32 = arith.constant 8 : i32
    %19 = arith.muli %arg0, %c8_i32 : i32
    %20 = vector.broadcast %19 : i32 to vector<8x1xi32>
    %21 = arith.addi %18, %20 : vector<8x1xi32>
    %22 = vector.broadcast %0 : i32 to vector<8x1xi32>
    %23 = arith.cmpi slt, %21, %22 : vector<8x1xi32>
    %24 = arith.subf %10, %17 : vector<8x1xf32>
    %cst_7 = arith.constant 0.000000e+00 : f32
    %25 = vector.broadcast %cst_7 : f32 to vector<8x1xf32>
    %26 = arith.select %23, %24, %25 : vector<8x1xi1>, vector<8x1xf32>
    %27 = vector.shape_cast %26 : vector<8x1xf32> to vector<1x8x1xf32>
    %cst_8 = arith.constant dense<0.000000e+00> : vector<1xf32>
    %28 = vector.multi_reduction <add>, %27, %cst_8 [1, 2] : vector<1x8x1xf32> to vector<1xf32>
    %29 = vector.shape_cast %28 : vector<1xf32> to vector<1x1x1xf32>
    %30 = vector.extract %29[0, 0, 0] : f32 from vector<1x1x1xf32>
    %31 = vector.broadcast %30 : f32 to vector<1x1xf32>
    %c0_9 = arith.constant 0 : index
    %c0_10 = arith.constant 0 : index
    %32 = vector.load %arg4[%c0_9, %c0_10] : memref<1x1xf32, #tpu.memory_space<vmem>>, vector<1x1xf32>
    tpu.vector_store %arg4[%c0_9, %c0_10], %31 {strides = array<i32>} : memref<1x1xf32, #tpu.memory_space<vmem>>, vector<1x1xf32>,
    return
  }
  func.func @transform_0(%arg0: i32, %arg1: memref<1xi32, #tpu.memory_space<smem>>) -> (i32, i32) {
    %c0_i32 = arith.constant 0 : i32
    %c0_i32_0 = arith.constant 0 : i32
    return %arg0, %c0_i32 : i32, i32
  }
  func.func @transform_1(%arg0: i32, %arg1: memref<1xi32, #tpu.memory_space<smem>>) -> (i32, i32) {
    %c0_i32 = arith.constant 0 : i32
    %c0_i32_0 = arith.constant 0 : i32
    return %arg0, %c0_i32 : i32, i32
  }
  func.func @transform_2(%arg0: i32, %arg1: memref<1xi32, #tpu.memory_space<smem>>) -> (i32, i32) {
    %c0_i32 = arith.constant 0 : i32
    %c0_i32_0 = arith.constant 0 : i32
    return %arg0, %c0_i32 : i32, i32
  }
}

</mosaic_0001>

<llo_original>
// kernel: tpu_custom_call.1
$region0: #{tpu_custom_call.1}
  #allocation0 [shape = 'u32[]', space=smem, size = 0x4, offset = 0x4, fixed_abs, tag = 'smem constant byte address 0x4 - core index']
  #allocation1 [shape = 'u32[72,128]{1,0:T(1,128)}', space=vmem, size = 0x9000, scoped, tag = 'internal scratch']
  #allocation2 [shape = 's32[1]{0}', space=sflag, size = 0x4, scoped, tag = 'scoped memory for tpu_custom_call.1']
  #allocation3 [shape = 's32[1]{0:T(128)S(6)}', space=smem, size = 0x200, scoped, tag = 'prefetched SMEM operand 0']
  %s0 = inlined_call_operand.<no memory space> [shape: s32[1], index: 0, kind: input, shape index: {}]
  %s1 = inlined_call_operand.vmem [shape: f32[8,32], index: 1, kind: input, shape index: {}]
  %s2 = inlined_call_operand.vmem [shape: s32[8,1], index: 2, kind: input, shape index: {}]
  %s3 = inlined_call_operand.hbm [shape: f32[1,1], index: 3, kind: output, shape index: {}]
  %s4 = sld [smem:[#allocation0]]
  $region18: #{tpu_custom_call.1} parent=0
    _
  %s6 = ssub.s32 1, %s4
  %s7 = scalar_select 0, %s6, %s4
  %8 = sst [smem:[#allocation3]] %s0
  $region1: #{tpu_custom_call.1} parent=0
    #allocation4 [shape = 'u8[512]{0}', space=vmem, size = 0x400, scoped, tag = 'output window, operand 0, single buffered']
    #allocation5 [shape = 's32[1]{0}', space=sflag, size = 0x4, scoped, tag = 'scoped memory for tpu_custom_call.1']
    %9 = vsyncpa [#allocation5], 0
    // Predicated region
    $region2: #{tpu_custom_call.1} parent=1 // pred_check
      _
    $region3: #{tpu_custom_call.1} parent=1 // pred_check_branch
      %11 = sbr.rel (0) target = $region5
    $region4: #{tpu_custom_call.1} parent=1 // pred_region
      _
    $region5: #{tpu_custom_call.1} parent=1 // pred_fallthru
      _
    // Predicated region
    $region6: #{tpu_custom_call.1} parent=1 // pred_check
      _
    $region7: #{tpu_custom_call.1} parent=1 // pred_check_branch
      %13 = sbr.rel (0) target = $region9
    $region8: #{tpu_custom_call.1} parent=1 // pred_region
      _
    $region9: #{tpu_custom_call.1} parent=1 // pred_fallthru
      _
    %s14 = sld [smem:[#allocation3]]
    %v15 = vld [vmem:[%s1] sm:$0xff]
    %v16 = vld [vmem:[%s2] sm:$0xff]
    %vm17 = vcmask 261120
    %v18 = vsel %vm17, %v15, -inf
    %19 = vmax.xlane.f32.xlu0 %v18
    %v20 = vpop.xlane.xlu0 %19
    %v21 = vsub.f32 %v15, %v20
    %v22 = vmul.f32 %v21, 1.442695
    %v23 = vpow.pop %v22
    %v24 = vsel %vm17, %v23, 0.0
    %25 = vadd.xlane.f32.xlu0 %v24
    %v26 = vpop.xlane.xlu0 %25
    %v27 = vlog2.pop %v26
    %v28 = vmul.f32 %v27, 0.6931472
    %v29 = vlaneseq
    %v30 = vand.u32 %v29, 127
    %31 = vset.pattern.permute.xlu0 0
    %32 = vperm.xlu0 %31, %v16
    %v33 = vpop.permute.xlu0 %32
    %vm34 = vcmp.eq.s32.totalorder %v30, %v33
    %v35 = vsel %vm34, %v21, 0.0
    %v36 = vsel %vm17, %v35, 0.0
    %37 = vadd.xlane.f32.xlu0 %v36
    %v38 = vpop.xlane.xlu0 %37
    %v39 = vlaneseq
    %v40 = vshrl.u32 %v39, 7
    %s41 = smul.u32 0, 8
    %v42 = vstv %s41
    %v43 = vadd.s32 %v40, %v42
    %v44 = vstv %s14
    %vm45 = vcmp.lt.s32.totalorder %v43, %v44
    %v46 = vsub.f32 %v28, %v38
    %v47 = vsel %vm45, %v46, 0.0
    %vm48 = vcmask 7168
    %v49 = vsel %vm48, %v47, 0.0
    %50 = vadd.xlane.f32.xlu0 %v49
    %v51 = vpop.xlane.xlu0 %50
    %v52 = vrot.slane %v51, 4
    %v53 = vadd.f32 %v51, %v52
    %v54 = vrot.slane %v53, 2
    %v55 = vadd.f32 %v53, %v54
    %v56 = vrot.slane %v55, 1
    %v57 = vadd.f32 %v55, %v56
    %s58 = vtos %v57
    %v59 = vstv %s58
    %vm60 = vcmask 0
    %61 = vst.msk [vmem:[#allocation4] sm:$0x1] %vm60, %v59
    // Predicated region
    $region10: #{tpu_custom_call.1} parent=1 // pred_check
      _
    $region11: #{tpu_custom_call.1} parent=1 // pred_check_branch
      %63 = sbr.rel (0) target = $region13
    $region12: #{tpu_custom_call.1} parent=1 // pred_region
      %65 = vsyncadd [#allocation5], 0
      %s67 = sshll.u32 [#allocation4], 4
      %s68 = int_to_ptr.vmem [resolvable:$true] %s67
      %s69 = sshll.u32 %s3, 4
      %s70 = int_to_ptr.hbm [resolvable:$true] %s69
      %72 = dma.vmem_to_hbm [thread:$0]  %s68, 16, %s70, [#allocation5]
    $region13: #{tpu_custom_call.1} parent=1 // pred_fallthru
      _
    // Predicated region
    $region14: #{tpu_custom_call.1} parent=1 // pred_check
      _
    $region15: #{tpu_custom_call.1} parent=1 // pred_check_branch
      %74 = sbr.rel (0) target = $region17
    $region16: #{tpu_custom_call.1} parent=1 // pred_region
      %76 = dma.done [#allocation5], 16
    $region17: #{tpu_custom_call.1} parent=1 // pred_fallthru
      _
    %77 = vsyncpa [#allocation5], 1

</llo_original>
